<compile_context>
chip_gen: v5e
topology: v5e:2x2
jax: 0.10.0
libtpu: 0.0.40
codegen_flags: <defaults>
</compile_context>

<pallas_src>
import functools

import jax
import jax.numpy as jnp
from jax import lax
from jax.experimental import pallas as pl
from jax.experimental.pallas import tpu as pltpu


def _round_up(x, m):
    return (x + m - 1) // m * m


def class_prediction_kernel(x_ref, w1_ref, b1_ref, w2_ref, b2_ref, tgt_ref,
                            loss_ref, acc_ref, *, true_b, needs_mask):
    i = pl.program_id(0)
    tb = x_ref.shape[0]

    @pl.when(i == 0)
    def _():
        acc_ref[...] = jnp.zeros_like(acc_ref)

    # ---- Linear 1 + Tanh (MXU matmul + VPU/EUP elementwise) ----
    x = x_ref[...].astype(jnp.float32)
    h = jnp.tanh(
        jnp.dot(x, w1_ref[...], preferred_element_type=jnp.float32)
        + b1_ref[...])

    # ---- Linear 2 ----
    z = (jnp.dot(h, w2_ref[...], preferred_element_type=jnp.float32)
         + b2_ref[...])
    n_classes = z.shape[1]

    # ---- Softmax over classes (dim=1); approx reciprocal -> EUP slot ----
    z_max = jnp.max(z, axis=1, keepdims=True)
    e = jnp.exp(z - z_max)
    p = e * pl.reciprocal(jnp.sum(e, axis=1, keepdims=True), approx=True)

    # ---- CrossEntropyLoss(p, target) ----
    # PyTorch CE applies log_softmax to p again: loss_i = lse_j(p_ij) - p_i[t_i]
    # p in (0, 1] -> exp(p) can't overflow, so no max-shift needed here.
    lse = jnp.log(jnp.sum(jnp.exp(p), axis=1, keepdims=True))
    cls = lax.broadcasted_iota(jnp.int32, (tb, n_classes), 1)
    picked = jnp.sum(jnp.where(cls == tgt_ref[...], p, 0.0),
                     axis=1, keepdims=True)
    per_example = lse - picked                                   # (tb, 1)

    # Mask batch-padding rows only when padding actually exists (static skip).
    if needs_mask:
        rows = lax.broadcasted_iota(jnp.int32, (tb, 1), 0) + i * tb
        per_example = jnp.where(rows < true_b, per_example, 0.0)

    # Accumulate sum of per-example losses across batch tiles.
    acc_ref[...] += jnp.sum(per_example, keepdims=True)          # (1, 1)

    @pl.when(i == pl.num_programs(0) - 1)
    def _():
        loss_ref[0, 0] = acc_ref[0, 0]


def class_prediction_loss(x, w1, b1, w2, b2, target, n_classes, tile_b=512):
    """x: (B, n_node) f32, target: (B,) int32 labels. Returns scalar loss.

    Weights are stored transposed vs. PyTorch: (in_features, out_features).
    """
    B, n_node = x.shape
    n_hidden = w1.shape[1]

    # Tile the batch; pad to a multiple of the tile (pad rows masked in-kernel).
    tb = min(tile_b, _round_up(B, 8))
    b_pad = _round_up(B, tb)
    n_tiles = b_pad // tb
    needs_mask = b_pad != B
    if needs_mask:
        x = jnp.pad(x, ((0, b_pad - B), (0, 0)))
        target = jnp.pad(target, (0, b_pad - B))

    tgt_col = target.astype(jnp.int32).reshape(b_pad, 1)
    b1_2d = b1.reshape(1, n_hidden)
    b2_2d = b2.reshape(1, n_classes)

    kernel = functools.partial(class_prediction_kernel,
                               true_b=B, needs_mask=needs_mask)

    loss_sum = pl.pallas_call(
        kernel,
        out_shape=jax.ShapeDtypeStruct((1, 1), jnp.float32),
        grid_spec=pltpu.PrefetchScalarGridSpec(
            num_scalar_prefetch=0,
            grid=(n_tiles,),
            in_specs=[
                pl.BlockSpec((tb, n_node), lambda i: (i, 0)),            # x tile
                pl.BlockSpec((n_node, n_hidden), lambda i: (0, 0)),      # W1 (resident)
                pl.BlockSpec((1, n_hidden), lambda i: (0, 0)),           # b1
                pl.BlockSpec((n_hidden, n_classes), lambda i: (0, 0)),   # W2 (resident)
                pl.BlockSpec((1, n_classes), lambda i: (0, 0)),          # b2
                pl.BlockSpec((tb, 1), lambda i: (i, 0)),                 # target column
            ],
            out_specs=pl.BlockSpec(memory_space=pltpu.MemorySpace.SMEM), # scalar out
            scratch_shapes=[pltpu.VMEM((1, 1), jnp.float32)],            # loss-sum acc
        ),
        # Accumulator carried across batch tiles -> "arbitrary".
        # TODO(synk): for v7x 2-TC sharding, emit per-tile partial sums and mark
        # this axis "parallel" instead of sharing a single accumulator.
        compiler_params=pltpu.CompilerParams(
            dimension_semantics=("arbitrary",)),
    )(x, w1, b1_2d, w2, b2_2d, tgt_col)
    return loss_sum[0, 0] / jnp.float32(B)


def _xavier_normal(key, fan_in, fan_out):
    # matches torch.nn.init.xavier_normal_ (gain=1)
    std = (2.0 / (fan_in + fan_out)) ** 0.5
    return jax.random.normal(key, (fan_in, fan_out), jnp.float32) * std


if __name__ == "__main__":
    # Small shapes consistent with the module's forward:
    #   graph_representation: (B, n_node), target: (B,) class labels
    B, n_node, n_hidden, n_classes = 8, 32, 32, 8

    key = jax.random.PRNGKey(0)
    kx, kt, kw1, kb1, kw2, kb2 = jax.random.split(key, 6)

    x = jax.random.normal(kx, (B, n_node), jnp.float32)
    target = jax.random.randint(kt, (B,), 0, n_classes, jnp.int32)

    # Deterministic parameter init mirroring _initialization():
    #   xavier_normal_ on weights, normal_(mean=0, std=1) on biases.
    w1 = _xavier_normal(kw1, n_node, n_hidden)      # stored as (in, out)
    b1 = jax.random.normal(kb1, (n_hidden,), jnp.float32)
    w2 = _xavier_normal(kw2, n_hidden, n_classes)   # stored as (in, out)
    b2 = jax.random.normal(kb2, (n_classes,), jnp.float32)

    loss = class_prediction_loss(x, w1, b1, w2, b2, target, n_classes)
    jax.block_until_ready(loss)

    # Pure-JAX reference (same math as the PyTorch module, incl. double softmax).
    h_ref = jnp.tanh(x @ w1 + b1)
    p_ref = jax.nn.softmax(h_ref @ w2 + b2, axis=1)
    ce_ref = jnp.mean(
        jax.nn.logsumexp(p_ref, axis=1)
        - jnp.take_along_axis(p_ref, target[:, None], axis=1)[:, 0])
    # pl.reciprocal(approx=True) in the kernel softmax -> relax tolerance
    # (relative error ~2^-12 on p, <~1e-3 on the loss).
    assert abs(float(loss) - float(ce_ref)) < 3e-3, (float(loss), float(ce_ref))

    print("KERNEL_OK")
</pallas_src>

<mosaic_0001>
module attributes {stable_mosaic.version = 11 : i64} {
  func.func @class_prediction_kernel(%arg0: i32, %arg1: memref<8x32xf32, #tpu.memory_space<vmem>>, %arg2: memref<32x32xf32, #tpu.memory_space<vmem>>, %arg3: memref<1x32xf32, #tpu.memory_space<vmem>>, %arg4: memref<32x8xf32, #tpu.memory_space<vmem>>, %arg5: memref<1x8xf32, #tpu.memory_space<vmem>>, %arg6: memref<8x1xi32, #tpu.memory_space<vmem>>, %arg7: memref<1x1xf32, #tpu.memory_space<smem>>, %arg8: memref<1x1xf32, #tpu.memory_space<vmem>>) attributes {dimension_semantics = [#tpu.dimension_semantics<arbitrary>], iteration_bounds = array<i64: 1>, scalar_prefetch = 0 : i64, scratch_operands = 1 : i64, tpu.core_type = #tpu.core_type<tc>, window_params = [{transform_indices = @transform_0, window_bounds = array<i64: 8, 32>}, {pipeline_mode = #tpu.pipeline_mode<synchronous>, transform_indices = @transform_1, window_bounds = array<i64: 32, 32>}, {pipeline_mode = #tpu.pipeline_mode<synchronous>, transform_indices = @transform_2, window_bounds = array<i64: 1, 32>}, {pipeline_mode = #tpu.pipeline_mode<synchronous>, transform_indices = @transform_3, window_bounds = array<i64: 32, 8>}, {pipeline_mode = #tpu.pipeline_mode<synchronous>, transform_indices = @transform_4, window_bounds = array<i64: 1, 8>}, {transform_indices = @transform_5, window_bounds = array<i64: 8, 1>}, {transform_indices = @transform_6, window_bounds = array<i64: 1, 1>}]} {
    %c0_i32 = arith.constant 0 : i32
    %0 = arith.cmpi eq, %arg0, %c0_i32 : i32
    %1 = arith.extui %0 : i1 to i32
    %c0_i32_0 = arith.constant 0 : i32
    %2 = arith.cmpi ne, %1, %c0_i32_0 : i32
    scf.if %2 {
      %cst_25 = arith.constant 0.000000e+00 : f32
      %49 = vector.broadcast %cst_25 : f32 to vector<1x1xf32>
      %c0_26 = arith.constant 0 : index
      %c0_27 = arith.constant 0 : index
      %50 = vector.load %arg8[%c0_26, %c0_27] : memref<1x1xf32, #tpu.memory_space<vmem>>, vector<1x1xf32>
      tpu.vector_store %arg8[%c0_26, %c0_27], %49 {strides = array<i32>} : memref<1x1xf32, #tpu.memory_space<vmem>>, vector<1x1xf32>,
    } else {
    }
    %c0 = arith.constant 0 : index
    %c0_1 = arith.constant 0 : index
    %3 = vector.load %arg1[%c0, %c0_1] : memref<8x32xf32, #tpu.memory_space<vmem>>, vector<8x32xf32>
    %c0_2 = arith.constant 0 : index
    %c0_3 = arith.constant 0 : index
    %4 = vector.load %arg2[%c0_2, %c0_3] : memref<32x32xf32, #tpu.memory_space<vmem>>, vector<32x32xf32>
    %cst = arith.constant dense<0.000000e+00> : vector<8x32xf32>
    %5 = tpu.matmul %3, %4, %cst {dimension_numbers = #tpu.dot_dimension_numbers<[1], [0], [0], [1], [0, 0, 1, 1], [], []>} : vector<8x32xf32>, vector<32x32xf32>, vector<8x32xf32> -> vector<8x32xf32>
    %c0_4 = arith.constant 0 : index
    %c0_5 = arith.constant 0 : index
    %6 = vector.load %arg3[%c0_4, %c0_5] : memref<1x32xf32, #tpu.memory_space<vmem>>, vector<1x32xf32>
    %7 = vector.broadcast %6 : vector<1x32xf32> to vector<8x32xf32>
    %8 = arith.addf %5, %7 : vector<8x32xf32>
    %9 = math.tanh %8 : vector<8x32xf32>
    %c0_6 = arith.constant 0 : index
    %c0_7 = arith.constant 0 : index
    %10 = vector.load %arg4[%c0_6, %c0_7] : memref<32x8xf32, #tpu.memory_space<vmem>>, vector<32x8xf32>
    %cst_8 = arith.constant dense<0.000000e+00> : vector<8x8xf32>
    %11 = tpu.matmul %9, %10, %cst_8 {dimension_numbers = #tpu.dot_dimension_numbers<[1], [0], [0], [1], [0, 0, 1, 1], [], []>} : vector<8x32xf32>, vector<32x8xf32>, vector<8x8xf32> -> vector<8x8xf32>
    %c0_9 = arith.constant 0 : index
    %c0_10 = arith.constant 0 : index
    %12 = vector.load %arg5[%c0_9, %c0_10] : memref<1x8xf32, #tpu.memory_space<vmem>>, vector<1x8xf32>
    %13 = vector.broadcast %12 : vector<1x8xf32> to vector<8x8xf32>
    %14 = arith.addf %11, %13 : vector<8x8xf32>
    %cst_11 = arith.constant dense<0xFF800000> : vector<8xf32>
    %15 = vector.multi_reduction <maximumf>, %14, %cst_11 [1] : vector<8x8xf32> to vector<8xf32>
    %16 = vector.shape_cast %15 : vector<8xf32> to vector<8x1xf32>
    %17 = vector.broadcast %16 : vector<8x1xf32> to vector<8x8xf32>
    %18 = arith.subf %14, %17 : vector<8x8xf32>
    %19 = math.exp %18 : vector<8x8xf32>
    %cst_12 = arith.constant dense<0.000000e+00> : vector<8xf32>
    %20 = vector.multi_reduction <add>, %19, %cst_12 [1] : vector<8x8xf32> to vector<8xf32>
    %21 = vector.shape_cast %20 : vector<8xf32> to vector<8x1xf32>
    %22 = tpu.reciprocal %21 {approx = true} : vector<8x1xf32> -> vector<8x1xf32>
    %23 = vector.broadcast %22 : vector<8x1xf32> to vector<8x8xf32>
    %24 = arith.mulf %19, %23 : vector<8x8xf32>
    %25 = math.exp %24 : vector<8x8xf32>
    %cst_13 = arith.constant dense<0.000000e+00> : vector<8xf32>
    %26 = vector.multi_reduction <add>, %25, %cst_13 [1] : vector<8x8xf32> to vector<8xf32>
    %27 = vector.shape_cast %26 : vector<8xf32> to vector<8x1xf32>
    %28 = math.log %27 : vector<8x1xf32>
    %29 = tpu.iota {dimensions = array<i32: 1>} : vector<8x8xi32>
    %c0_14 = arith.constant 0 : index
    %c0_15 = arith.constant 0 : index
    %30 = vector.load %arg6[%c0_14, %c0_15] : memref<8x1xi32, #tpu.memory_space<vmem>>, vector<8x1xi32>
    %31 = vector.broadcast %30 : vector<8x1xi32> to vector<8x8xi32>
    %32 = arith.cmpi eq, %29, %31 : vector<8x8xi32>
    %cst_16 = arith.constant 0.000000e+00 : f32
    %33 = vector.broadcast %cst_16 : f32 to vector<8x8xf32>
    %34 = arith.select %32, %24, %33 : vector<8x8xi1>, vector<8x8xf32>
    %cst_17 = arith.constant dense<0.000000e+00> : vector<8xf32>
    %35 = vector.multi_reduction <add>, %34, %cst_17 [1] : vector<8x8xf32> to vector<8xf32>
    %36 = vector.shape_cast %35 : vector<8xf32> to vector<8x1xf32>
    %37 = arith.subf %28, %36 : vector<8x1xf32>
    %c0_18 = arith.constant 0 : index
    %c0_19 = arith.constant 0 : index
    %38 = vector.load %arg8[%c0_18, %c0_19] : memref<1x1xf32, #tpu.memory_space<vmem>>, vector<1x1xf32>
    %39 = vector.shape_cast %37 : vector<8x1xf32> to vector<1x8x1xf32>
    %cst_20 = arith.constant dense<0.000000e+00> : vector<1xf32>
    %40 = vector.multi_reduction <add>, %39, %cst_20 [1, 2] : vector<1x8x1xf32> to vector<1xf32>
    %41 = vector.shape_cast %40 : vector<1xf32> to vector<1x1x1xf32>
    %42 = vector.extract %41[0, 0, 0] : f32 from vector<1x1x1xf32>
    %43 = vector.broadcast %42 : f32 to vector<1x1xf32>
    %44 = arith.addf %38, %43 : vector<1x1xf32>
    %c0_21 = arith.constant 0 : index
    %c0_22 = arith.constant 0 : index
    %45 = vector.load %arg8[%c0_21, %c0_22] : memref<1x1xf32, #tpu.memory_space<vmem>>, vector<1x1xf32>
    tpu.vector_store %arg8[%c0_21, %c0_22], %44 {strides = array<i32>} : memref<1x1xf32, #tpu.memory_space<vmem>>, vector<1x1xf32>,
    %c0_i32_23 = arith.constant 0 : i32
    %46 = arith.cmpi eq, %arg0, %c0_i32_23 : i32
    %47 = arith.extui %46 : i1 to i32
    %c0_i32_24 = arith.constant 0 : i32
    %48 = arith.cmpi ne, %47, %c0_i32_24 : i32
    scf.if %48 {
      %c0_25 = arith.constant 0 : index
      %c0_26 = arith.constant 0 : index
      %49 = vector.load %arg8[%c0_25, %c0_26] : memref<1x1xf32, #tpu.memory_space<vmem>>, vector<1x1xf32>
      %50 = vector.extract %49[0, 0] : f32 from vector<1x1xf32>
      %c0_27 = arith.constant 0 : index
      %c0_28 = arith.constant 0 : index
      %51 = memref.load %arg7[%c0_27, %c0_28] : memref<1x1xf32, #tpu.memory_space<smem>>
      memref.store %50, %arg7[%c0_27, %c0_28] : memref<1x1xf32, #tpu.memory_space<smem>>
    } else {
    }
    return
  }
  func.func @transform_0(%arg0: i32) -> (i32, i32) {
    %c0_i32 = arith.constant 0 : i32
    %c0_i32_0 = arith.constant 0 : i32
    return %arg0, %c0_i32 : i32, i32
  }
  func.func @transform_1(%arg0: i32) -> (i32, i32) {
    %c0_i32 = arith.constant 0 : i32
    %c0_i32_0 = arith.constant 0 : i32
    %c0_i32_1 = arith.constant 0 : i32
    return %c0_i32, %c0_i32_0 : i32, i32
  }
  func.func @transform_2(%arg0: i32) -> (i32, i32) {
    %c0_i32 = arith.constant 0 : i32
    %c0_i32_0 = arith.constant 0 : i32
    %c0_i32_1 = arith.constant 0 : i32
    return %c0_i32, %c0_i32_0 : i32, i32
  }
  func.func @transform_3(%arg0: i32) -> (i32, i32) {
    %c0_i32 = arith.constant 0 : i32
    %c0_i32_0 = arith.constant 0 : i32
    %c0_i32_1 = arith.constant 0 : i32
    return %c0_i32, %c0_i32_0 : i32, i32
  }
  func.func @transform_4(%arg0: i32) -> (i32, i32) {
    %c0_i32 = arith.constant 0 : i32
    %c0_i32_0 = arith.constant 0 : i32
    %c0_i32_1 = arith.constant 0 : i32
    return %c0_i32, %c0_i32_0 : i32, i32
  }
  func.func @transform_5(%arg0: i32) -> (i32, i32) {
    %c0_i32 = arith.constant 0 : i32
    %c0_i32_0 = arith.constant 0 : i32
    return %arg0, %c0_i32 : i32, i32
  }
  func.func @transform_6(%arg0: i32) -> (i32, i32) {
    %c0_i32 = arith.constant 0 : i32
    %c0_i32_0 = arith.constant 0 : i32
    %c0_i32_1 = arith.constant 0 : i32
    return %c0_i32, %c0_i32_0 : i32, i32
  }
}

</mosaic_0001>

<llo_original>
// kernel: tpu_custom_call.1
$region0: #{tpu_custom_call.1}
  #allocation0 [shape = 'u32[]', space=smem, size = 0x4, offset = 0x4, fixed_abs, tag = 'smem constant byte address 0x4 - core index']
  #allocation1 [shape = 'u32[72,128]{1,0:T(1,128)}', space=vmem, size = 0x9000, scoped, tag = 'internal scratch']
  #allocation2 [shape = 'f32[1,1]{1,0:T(1,128)}', space=vmem, size = 0x200, scoped, tag = 'scratch operand']
  %s0 = inlined_call_operand.vmem [shape: f32[8,32], index: 0, kind: input, shape index: {}]
  %s1 = inlined_call_operand.vmem [shape: f32[32,32], index: 1, kind: input, shape index: {}]
  %s2 = inlined_call_operand.vmem [shape: f32[1,32], index: 2, kind: input, shape index: {}]
  %s3 = inlined_call_operand.vmem [shape: f32[32,8], index: 3, kind: input, shape index: {}]
  %s4 = inlined_call_operand.vmem [shape: f32[1,8], index: 4, kind: input, shape index: {}]
  %s5 = inlined_call_operand.vmem [shape: s32[8,1], index: 5, kind: input, shape index: {}]
  %s6 = inlined_call_operand.hbm [shape: f32[1,1], index: 6, kind: output, shape index: {}]
  %s7 = sld [smem:[#allocation0]]
  $region42: #{tpu_custom_call.1} parent=0
    _
  %s9 = ssub.s32 1, %s7
  %s10 = scalar_select 0, %s9, %s7
  $region1: #{tpu_custom_call.1} parent=0
    #allocation3 [shape = 'u8[512]{0}', space=smem, size = 0x200, scoped, tag = 'output window, operand 0, single buffered']
    #allocation4 [shape = 's32[1]{0}', space=sflag, size = 0x4, scoped, tag = 'scoped memory for tpu_custom_call.1']
    %11 = vsyncpa [#allocation4], 0
    // Predicated region
    $region2: #{tpu_custom_call.1} parent=1 // pred_check
      _
    $region3: #{tpu_custom_call.1} parent=1 // pred_check_branch
      %13 = sbr.rel (0) target = $region5
    $region4: #{tpu_custom_call.1} parent=1 // pred_region
      _
    $region5: #{tpu_custom_call.1} parent=1 // pred_fallthru
      _
    // Predicated region
    $region6: #{tpu_custom_call.1} parent=1 // pred_check
      _
    $region7: #{tpu_custom_call.1} parent=1 // pred_check_branch
      %15 = sbr.rel (0) target = $region9
    $region8: #{tpu_custom_call.1} parent=1 // pred_region
      _
    $region9: #{tpu_custom_call.1} parent=1 // pred_fallthru
      _
    // Predicated region
    $region10: #{tpu_custom_call.1} parent=1 // pred_check
      _
    $region11: #{tpu_custom_call.1} parent=1 // pred_check_branch
      %17 = sbr.rel (0) target = $region13
    $region12: #{tpu_custom_call.1} parent=1 // pred_region
      _
    $region13: #{tpu_custom_call.1} parent=1 // pred_fallthru
      _
    // Predicated region
    $region14: #{tpu_custom_call.1} parent=1 // pred_check
      _
    $region15: #{tpu_custom_call.1} parent=1 // pred_check_branch
      %19 = sbr.rel (0) target = $region17
    $region16: #{tpu_custom_call.1} parent=1 // pred_region
      _
    $region17: #{tpu_custom_call.1} parent=1 // pred_fallthru
      _
    // Predicated region
    $region18: #{tpu_custom_call.1} parent=1 // pred_check
      _
    $region19: #{tpu_custom_call.1} parent=1 // pred_check_branch
      %21 = sbr.rel (0) target = $region21
    $region20: #{tpu_custom_call.1} parent=1 // pred_region
      _
    $region21: #{tpu_custom_call.1} parent=1 // pred_fallthru
      _
    // Predicated region
    $region22: #{tpu_custom_call.1} parent=1 // pred_check
      _
    $region23: #{tpu_custom_call.1} parent=1 // pred_check_branch
      %23 = sbr.rel (0) target = $region25
    $region24: #{tpu_custom_call.1} parent=1 // pred_region
      _
    $region25: #{tpu_custom_call.1} parent=1 // pred_fallthru
      _
    %p24 = scmp.eq.s32.totalorder 0, 0
    // Predicated region
    $region26: #{tpu_custom_call.1} parent=1 // pred_check
      %p25 = pneg %p24
    $region27: #{tpu_custom_call.1} parent=1 // pred_check_branch
      %27 = sbr.rel (%p25) target = $region29
    $region28: #{tpu_custom_call.1} parent=1 // pred_region
      %vm28 = vcmask 0
      %29 = vst.msk [vmem:[#allocation2] sm:$0x1] %vm28, 0.0
    $region29: #{tpu_custom_call.1} parent=1 // pred_fallthru
      _
    %v30 = vld [vmem:[%s0] sm:$0xff]
    %v31 = vld [vmem:[%s1] sm:$0xff]
    %v32 = vld [vmem:[%s1 + $0x8] sm:$0xff]
    %v33 = vld [vmem:[%s1 + $0x10] sm:$0xff]
    %v34 = vld [vmem:[%s1 + $0x18] sm:$0xff]
    %v35 = vld [vmem:[%s2] sm:$0x1]
    %v37 = vperm.slane %v35, 0
    %vm39 = vcmask 261120
    %v41 = vsel %vm39, %v30, 0
    %43 = vmatpush.msra.mxu0 0.0
    %44 = vmatpush.msra.mxu0 0.0
    %45 = vmatpush.msra.mxu0 0.0
    %46 = vmatpush.msra.mxu0 0.0
    %47 = vmatpush.msra.mxu0 0.0
    %48 = vmatpush.msra.mxu0 0.0
    %49 = vmatpush.msra.mxu0 0.0
    %50 = vmatpush.msra.mxu0 0.0
    %51 = vmatpush.msra.mxu0 0.0
    %52 = vmatpush.msra.mxu0 0.0
    %53 = vmatpush.msra.mxu0 0.0
    %54 = vmatpush.msra.mxu0 0.0
    %55 = vmatpush.msra.mxu0 %v34
    %56 = vmatpush.msra.mxu0 %v33
    %57 = vmatpush.msra.mxu0 %v32
    %58 = vmatpush.msra.mxu0 %v31
    %59 = vmatmul.f32.gmra.mxu0 %v41
    %v60 = vpop.f32.mrf.mxu0
    %v61 = vadd.f32 %v37, %v60
    %62 = vdwg.mxu0
    %v63 = vtanh.pop %v61
    %v64 = vld [vmem:[%s3] sm:$0xff]
    %v65 = vld [vmem:[%s3 + $0x8] sm:$0xff]
    %v66 = vld [vmem:[%s3 + $0x10] sm:$0xff]
    %v67 = vld [vmem:[%s3 + $0x18] sm:$0xff]
    %v68 = vld [vmem:[%s4] sm:$0x1]
    %v70 = vperm.slane %v68, 0
    %v73 = vsel %vm39, %v63, 0
    %75 = vmatpush.msra.mxu0 0.0
    %76 = vmatpush.msra.mxu0 0.0
    %77 = vmatpush.msra.mxu0 0.0
    %78 = vmatpush.msra.mxu0 0.0
    %79 = vmatpush.msra.mxu0 0.0
    %80 = vmatpush.msra.mxu0 0.0
    %81 = vmatpush.msra.mxu0 0.0
    %82 = vmatpush.msra.mxu0 0.0
    %83 = vmatpush.msra.mxu0 0.0
    %84 = vmatpush.msra.mxu0 0.0
    %85 = vmatpush.msra.mxu0 0.0
    %86 = vmatpush.msra.mxu0 0.0
    %87 = vmatpush.msra.mxu0 %v67
    %88 = vmatpush.msra.mxu0 %v66
    %89 = vmatpush.msra.mxu0 %v65
    %90 = vmatpush.msra.mxu0 %v64
    %91 = vmatmul.f32.gmra.mxu0 %v73
    %v92 = vpop.f32.mrf.mxu0
    %v93 = vadd.f32 %v70, %v92
    %94 = vdwg.mxu0
    %vm95 = vcmask 64512
    %v96 = vsel %vm95, %v93, -inf
    %97 = vmax.xlane.f32.xlu0 %v96
    %v98 = vpop.xlane.xlu0 %97
    %v99 = vsub.f32 %v93, %v98
    %v100 = vmul.f32 %v99, 1.442695
    %v101 = vpow.pop %v100
    %v102 = vsel %vm95, %v101, 0.0
    %103 = vadd.xlane.f32.xlu0 %v102
    %v104 = vpop.xlane.xlu0 %103
    %v105 = vrcp.pop %v104
    %v106 = vmul.f32 %v101, %v105
    %v107 = vmul.f32 %v106, 1.442695
    %v108 = vpow.pop %v107
    %v109 = vsel %vm95, %v108, 0.0
    %110 = vadd.xlane.f32.xlu0 %v109
    %v111 = vpop.xlane.xlu0 %110
    %v112 = vlog2.pop %v111
    %v113 = vmul.f32 %v112, 0.6931472
    %v114 = vlaneseq
    %v115 = vand.u32 %v114, 127
    %v116 = vld [vmem:[%s5] sm:$0xff]
    %117 = vset.pattern.permute.xlu0 0
    %118 = vperm.xlu0 %117, %v116
    %v119 = vpop.permute.xlu0 %118
    %vm120 = vcmp.eq.s32.totalorder %v115, %v119
    %v121 = vsel %vm120, %v106, 0.0
    %v122 = vsel %vm95, %v121, 0.0
    %123 = vadd.xlane.f32.xlu0 %v122
    %v124 = vpop.xlane.xlu0 %123
    %v125 = vsub.f32 %v113, %v124
    %v126 = vld [vmem:[#allocation2] sm:$0x1]
    %vm127 = vcmask 7168
    %v128 = vsel %vm127, %v125, 0.0
    %129 = vadd.xlane.f32.xlu0 %v128
    %v130 = vpop.xlane.xlu0 %129
    %v131 = vrot.slane %v130, 4
    %v132 = vadd.f32 %v130, %v131
    %v133 = vrot.slane %v132, 2
    %v134 = vadd.f32 %v132, %v133
    %v135 = vrot.slane %v134, 1
    %v136 = vadd.f32 %v134, %v135
    %s137 = vtos %v136
    %v138 = vstv %s137
    %v139 = vadd.f32 %v126, %v138
    %vm140 = vcmask 0
    %141 = vst.msk [vmem:[#allocation2] sm:$0x1] %vm140, %v139
    // Predicated region
    $region30: #{tpu_custom_call.1} parent=1 // pred_check
      %p142 = pneg %p24
    $region31: #{tpu_custom_call.1} parent=1 // pred_check_branch
      %144 = sbr.rel (%p142) target = $region33
    $region32: #{tpu_custom_call.1} parent=1 // pred_region
      %v145 = vld [vmem:[#allocation2] sm:$0x1]
      %s146 = vtos %v145
      %s147 = scalar_lea.smem [#allocation3], 0
      %148 = sst [smem:[%s147]] %s146
    $region33: #{tpu_custom_call.1} parent=1 // pred_fallthru
      _
    // Predicated region
    $region34: #{tpu_custom_call.1} parent=1 // pred_check
      _
    $region35: #{tpu_custom_call.1} parent=1 // pred_check_branch
      %150 = sbr.rel (0) target = $region37
    $region36: #{tpu_custom_call.1} parent=1 // pred_region
      %152 = vsyncadd [#allocation4], 0
      %s154 = sshll.u32 %s6, 4
      %s155 = int_to_ptr.hbm [resolvable:$true] %s154
      %157 = dma.smem_to_hbm [#allocation3], 16, %s155, [#allocation4]
    $region37: #{tpu_custom_call.1} parent=1 // pred_fallthru
      _
    // Predicated region
    $region38: #{tpu_custom_call.1} parent=1 // pred_check
      _
    $region39: #{tpu_custom_call.1} parent=1 // pred_check_branch
      %159 = sbr.rel (0) target = $region41
    $region40: #{tpu_custom_call.1} parent=1 // pred_region
      %161 = dma.done [#allocation4], 16
    $region41: #{tpu_custom_call.1} parent=1 // pred_fallthru
      _
    %162 = sfence
    %163 = vsyncpa [#allocation4], 1

</llo_original>
